<compile_context>
chip_gen: v6e
topology: v6e:2x2x1
jax: 0.10.0
libtpu: 0.0.40
codegen_flags: <defaults>
</compile_context>

<pallas_src>
import jax
import jax.numpy as jnp
from jax import lax
from jax.experimental import pallas as pl
from jax.experimental.pallas import tpu as pltpu

EPS = 1e-5
_VMEM_LIMIT = 32 * 1024 * 1024  # explicit & safe on v5e/v6e/v7x; tiles here are tiny.


def _pick_m_tile(hw: int, cap: int = 2048) -> int:
    """Largest multiple of 128 that divides hw (capped at `cap`), else full extent."""
    if hw % 128 != 0:
        return hw
    t = min(hw, cap)
    t -= t % 128
    while hw % t != 0:
        t -= 128
    return t


# ---------------------------------------------------------------------------
# Pass 1: per-batch partial sums of y and y^2 (y = W @ x), streamed over M.
# ---------------------------------------------------------------------------
def _stats_kernel(x_ref, w_ref, sum_ref, sumsq_ref):
    # x_ref:     (1, C_in, M_TILE)   activation tile (lane axis = spatial)
    # w_ref:     (C_out, C_in)       conv weight, resident across the grid
    # sum_ref:   (1, C_out, 1)       running sum of y   for this batch element
    # sumsq_ref: (1, C_out, 1)       running sum of y^2 for this batch element
    @pl.when(pl.program_id(1) == 0)
    def _():
        sum_ref[...] = jnp.zeros_like(sum_ref)
        sumsq_ref[...] = jnp.zeros_like(sumsq_ref)

    y = jnp.dot(w_ref[...], x_ref[0],
                preferred_element_type=jnp.float32)          # (C_out, M_TILE)
    sum_ref[0] += jnp.sum(y, axis=1, keepdims=True)          # (C_out, 1)
    sumsq_ref[0] += jnp.sum(y * y, axis=1, keepdims=True)    # (C_out, 1)


# ---------------------------------------------------------------------------
# Pass 2: streaming fused 1x1-conv + folded-BN affine + ReLU.
# ---------------------------------------------------------------------------
def _matmul_bias_relu_kernel(x_ref, w_ref, b_ref, o_ref):
    # x_ref: (1, C_in, M_TILE); w_ref: (C_out, C_in); b_ref: (C_out, 1)
    # o_ref: (1, C_out, M_TILE)   lane-dense output block
    y = jnp.dot(w_ref[...], x_ref[0], preferred_element_type=jnp.float32)
    o_ref[0] = jnp.maximum(y + b_ref[...], 0.0).astype(o_ref.dtype)


def shuffle_basic_block_3_forward(x_nchw, weight, gamma, beta, eps=EPS):
    """x_nchw: (N, 3, H, W) f32; weight: (24, 3); gamma/beta: (24,)."""
    n, c_in, h, w = x_nchw.shape
    c_out = weight.shape[0]
    hw = h * w
    m_total = n * hw
    m_tile = _pick_m_tile(hw)
    num_tiles = hw // m_tile

    x3 = x_nchw.reshape(n, c_in, hw).astype(jnp.float32)  # free reshape, stays channel-major
    w32 = weight.astype(jnp.float32)

    # -------- pass 1: batch statistics --------
    sums, sumsqs = pl.pallas_call(
        _stats_kernel,
        out_shape=(jax.ShapeDtypeStruct((n, c_out, 1), jnp.float32),
                   jax.ShapeDtypeStruct((n, c_out, 1), jnp.float32)),
        grid_spec=pltpu.PrefetchScalarGridSpec(
            num_scalar_prefetch=0,
            grid=(n, num_tiles),
            in_specs=[
                pl.BlockSpec((1, c_in, m_tile), lambda b, t: (b, 0, t)),
                pl.BlockSpec((c_out, c_in), lambda b, t: (0, 0)),
            ],
            out_specs=[
                pl.BlockSpec((1, c_out, 1), lambda b, t: (b, 0, 0)),
                pl.BlockSpec((1, c_out, 1), lambda b, t: (b, 0, 0)),
            ],
        ),
        compiler_params=pltpu.CompilerParams(
            dimension_semantics=("parallel", "arbitrary"),
            vmem_limit_bytes=_VMEM_LIMIT),
    )(x3, w32)

    # -------- fold BN (training mode, biased variance) into conv weights --------
    sum_y = jnp.sum(sums[:, :, 0], axis=0)       # (C_out,)
    sum_y2 = jnp.sum(sumsqs[:, :, 0], axis=0)    # (C_out,)
    mean = sum_y / m_total
    var = jnp.maximum(sum_y2 / m_total - mean * mean, 0.0)   # biased variance
    inv_std = lax.rsqrt(var + eps)
    scale = gamma.astype(jnp.float32) * inv_std              # (C_out,)
    w_folded = w32 * scale[:, None]                          # (C_out, C_in)
    b_folded = (beta.astype(jnp.float32) - mean * scale).reshape(c_out, 1)
    # TODO(synk): training-mode BatchNorm also updates running_mean/running_var;
    # module-state updates are not produced here (forward output only).

    # -------- pass 2: streaming relu(W' @ x + b') --------
    out3 = pl.pallas_call(
        _matmul_bias_relu_kernel,
        out_shape=jax.ShapeDtypeStruct((n, c_out, hw), jnp.float32),
        grid_spec=pltpu.PrefetchScalarGridSpec(
            num_scalar_prefetch=0,
            grid=(n, num_tiles),
            in_specs=[
                pl.BlockSpec((1, c_in, m_tile), lambda b, t: (b, 0, t)),
                pl.BlockSpec((c_out, c_in), lambda b, t: (0, 0)),
                pl.BlockSpec((c_out, 1), lambda b, t: (0, 0)),
            ],
            out_specs=pl.BlockSpec((1, c_out, m_tile), lambda b, t: (b, 0, t)),
        ),
        compiler_params=pltpu.CompilerParams(
            dimension_semantics=("parallel", "parallel"),
            vmem_limit_bytes=_VMEM_LIMIT),
    )(x3, w_folded, b_folded)

    return out3.reshape(n, c_out, h, w)


def _reference(x_nchw, weight, gamma, beta):
    # Pure-JAX reference of the same semantics (training-mode BN).
    y = jnp.einsum("nchw,oc->nohw", x_nchw, weight)
    mean = jnp.mean(y, axis=(0, 2, 3), keepdims=True)
    var = jnp.mean((y - mean) ** 2, axis=(0, 2, 3), keepdims=True)
    yn = (y - mean) * lax.rsqrt(var + EPS)
    out = yn * gamma.reshape(1, -1, 1, 1) + beta.reshape(1, -1, 1, 1)
    return jnp.maximum(out, 0.0)


if __name__ == "__main__":
    key = jax.random.PRNGKey(0)
    k_x, k_w, k_g, k_b = jax.random.split(key, 4)

    N, C_IN, H, W = 2, 3, 16, 16
    C_OUT = 24

    x = jax.random.normal(k_x, (N, C_IN, H, W), dtype=jnp.float32)
    weight = jax.random.normal(k_w, (C_OUT, C_IN), dtype=jnp.float32) * 0.1
    gamma = 1.0 + 0.1 * jax.random.normal(k_g, (C_OUT,), dtype=jnp.float32)
    beta = 0.1 * jax.random.normal(k_b, (C_OUT,), dtype=jnp.float32)

    out = shuffle_basic_block_3_forward(x, weight, gamma, beta)
    out = jax.block_until_ready(out)

    ref = _reference(x, weight, gamma, beta)
    assert out.shape == (N, C_OUT, H, W)
    assert jnp.allclose(out, ref, atol=1e-4, rtol=1e-4), "mismatch vs reference"

    print("KERNEL_OK")
</pallas_src>

<mosaic_0001>
module attributes {stable_mosaic.version = 11 : i64} {
  func.func @_stats_kernel(%arg0: i32, %arg1: i32, %arg2: memref<1x3x256xf32, #tpu.memory_space<vmem>>, %arg3: memref<24x3xf32, #tpu.memory_space<vmem>>, %arg4: memref<1x24x1xf32, #tpu.memory_space<vmem>>, %arg5: memref<1x24x1xf32, #tpu.memory_space<vmem>>) attributes {dimension_semantics = [#tpu.dimension_semantics<parallel>, #tpu.dimension_semantics<arbitrary>], iteration_bounds = array<i64: 2, 1>, scalar_prefetch = 0 : i64, scratch_operands = 0 : i64, tpu.core_type = #tpu.core_type<tc>, window_params = [{transform_indices = @transform_0, window_bounds = array<i64: 1, 3, 256>}, {pipeline_mode = #tpu.pipeline_mode<synchronous>, transform_indices = @transform_1, window_bounds = array<i64: 24, 3>}, {transform_indices = @transform_2, window_bounds = array<i64: 1, 24, 1>}, {transform_indices = @transform_3, window_bounds = array<i64: 1, 24, 1>}]} {
    %c0_i32 = arith.constant 0 : i32
    %0 = arith.cmpi eq, %arg1, %c0_i32 : i32
    %1 = arith.extui %0 : i1 to i32
    %c0_i32_0 = arith.constant 0 : i32
    %2 = arith.cmpi ne, %1, %c0_i32_0 : i32
    scf.if %2 {
      %cst_19 = arith.constant 0.000000e+00 : f32
      %24 = vector.broadcast %cst_19 : f32 to vector<1x24x1xf32>
      %c0_20 = arith.constant 0 : index
      %c0_21 = arith.constant 0 : index
      %c0_22 = arith.constant 0 : index
      %25 = vector.load %arg4[%c0_20, %c0_21, %c0_22] : memref<1x24x1xf32, #tpu.memory_space<vmem>>, vector<1x24x1xf32>
      tpu.vector_store %arg4[%c0_20, %c0_21, %c0_22], %24 {strides = array<i32>} : memref<1x24x1xf32, #tpu.memory_space<vmem>>, vector<1x24x1xf32>,
      %cst_23 = arith.constant 0.000000e+00 : f32
      %26 = vector.broadcast %cst_23 : f32 to vector<1x24x1xf32>
      %c0_24 = arith.constant 0 : index
      %c0_25 = arith.constant 0 : index
      %c0_26 = arith.constant 0 : index
      %27 = vector.load %arg5[%c0_24, %c0_25, %c0_26] : memref<1x24x1xf32, #tpu.memory_space<vmem>>, vector<1x24x1xf32>
      tpu.vector_store %arg5[%c0_24, %c0_25, %c0_26], %26 {strides = array<i32>} : memref<1x24x1xf32, #tpu.memory_space<vmem>>, vector<1x24x1xf32>,
    } else {
    }
    %c0 = arith.constant 0 : index
    %c0_1 = arith.constant 0 : index
    %3 = vector.load %arg3[%c0, %c0_1] : memref<24x3xf32, #tpu.memory_space<vmem>>, vector<24x3xf32>
    %c0_2 = arith.constant 0 : index
    %c0_3 = arith.constant 0 : index
    %c0_4 = arith.constant 0 : index
    %4 = vector.load %arg2[%c0_2, %c0_3, %c0_4] : memref<1x3x256xf32, #tpu.memory_space<vmem>>, vector<1x3x256xf32>
    %5 = vector.shape_cast %4 : vector<1x3x256xf32> to vector<3x256xf32>
    %cst = arith.constant dense<0.000000e+00> : vector<24x256xf32>
    %6 = tpu.matmul %3, %5, %cst {dimension_numbers = #tpu.dot_dimension_numbers<[1], [0], [0], [1], [0, 0, 1, 1], [], []>} : vector<24x3xf32>, vector<3x256xf32>, vector<24x256xf32> -> vector<24x256xf32>
    %c0_5 = arith.constant 0 : index
    %c0_6 = arith.constant 0 : index
    %c0_7 = arith.constant 0 : index
    %7 = vector.load %arg4[%c0_5, %c0_6, %c0_7] : memref<1x24x1xf32, #tpu.memory_space<vmem>>, vector<1x24x1xf32>
    %8 = vector.shape_cast %7 : vector<1x24x1xf32> to vector<24x1xf32>
    %cst_8 = arith.constant dense<0.000000e+00> : vector<24xf32>
    %9 = vector.multi_reduction <add>, %6, %cst_8 [1] : vector<24x256xf32> to vector<24xf32>
    %10 = vector.shape_cast %9 : vector<24xf32> to vector<24x1xf32>
    %11 = arith.addf %8, %10 : vector<24x1xf32>
    %c0_9 = arith.constant 0 : index
    %c0_10 = arith.constant 0 : index
    %c0_11 = arith.constant 0 : index
    %12 = vector.load %arg4[%c0_9, %c0_10, %c0_11] : memref<1x24x1xf32, #tpu.memory_space<vmem>>, vector<1x24x1xf32>
    %13 = vector.shape_cast %12 : vector<1x24x1xf32> to vector<24x1xf32>
    %14 = vector.shape_cast %11 : vector<24x1xf32> to vector<1x24x1xf32>
    tpu.vector_store %arg4[%c0_9, %c0_10, %c0_11], %14 {strides = array<i32>} : memref<1x24x1xf32, #tpu.memory_space<vmem>>, vector<1x24x1xf32>,
    %c0_12 = arith.constant 0 : index
    %c0_13 = arith.constant 0 : index
    %c0_14 = arith.constant 0 : index
    %15 = vector.load %arg5[%c0_12, %c0_13, %c0_14] : memref<1x24x1xf32, #tpu.memory_space<vmem>>, vector<1x24x1xf32>
    %16 = vector.shape_cast %15 : vector<1x24x1xf32> to vector<24x1xf32>
    %17 = arith.mulf %6, %6 : vector<24x256xf32>
    %cst_15 = arith.constant dense<0.000000e+00> : vector<24xf32>
    %18 = vector.multi_reduction <add>, %17, %cst_15 [1] : vector<24x256xf32> to vector<24xf32>
    %19 = vector.shape_cast %18 : vector<24xf32> to vector<24x1xf32>
    %20 = arith.addf %16, %19 : vector<24x1xf32>
    %c0_16 = arith.constant 0 : index
    %c0_17 = arith.constant 0 : index
    %c0_18 = arith.constant 0 : index
    %21 = vector.load %arg5[%c0_16, %c0_17, %c0_18] : memref<1x24x1xf32, #tpu.memory_space<vmem>>, vector<1x24x1xf32>
    %22 = vector.shape_cast %21 : vector<1x24x1xf32> to vector<24x1xf32>
    %23 = vector.shape_cast %20 : vector<24x1xf32> to vector<1x24x1xf32>
    tpu.vector_store %arg5[%c0_16, %c0_17, %c0_18], %23 {strides = array<i32>} : memref<1x24x1xf32, #tpu.memory_space<vmem>>, vector<1x24x1xf32>,
    return
  }
  func.func @transform_0(%arg0: i32, %arg1: i32) -> (i32, i32, i32) {
    %c0_i32 = arith.constant 0 : i32
    %c0_i32_0 = arith.constant 0 : i32
    return %arg0, %c0_i32, %arg1 : i32, i32, i32
  }
  func.func @transform_1(%arg0: i32, %arg1: i32) -> (i32, i32) {
    %c0_i32 = arith.constant 0 : i32
    %c0_i32_0 = arith.constant 0 : i32
    %c0_i32_1 = arith.constant 0 : i32
    return %c0_i32, %c0_i32_0 : i32, i32
  }
  func.func @transform_2(%arg0: i32, %arg1: i32) -> (i32, i32, i32) {
    %c0_i32 = arith.constant 0 : i32
    %c0_i32_0 = arith.constant 0 : i32
    %c0_i32_1 = arith.constant 0 : i32
    return %arg0, %c0_i32, %c0_i32_0 : i32, i32, i32
  }
  func.func @transform_3(%arg0: i32, %arg1: i32) -> (i32, i32, i32) {
    %c0_i32 = arith.constant 0 : i32
    %c0_i32_0 = arith.constant 0 : i32
    %c0_i32_1 = arith.constant 0 : i32
    return %arg0, %c0_i32, %c0_i32_0 : i32, i32, i32
  }
}

</mosaic_0001>

<llo_original>
// kernel: tpu_custom_call.1
$region0: #{tpu_custom_call.1}
  #allocation0 [shape = 'u32[]', space=smem, size = 0x4, offset = 0x4, fixed_abs, tag = 'smem constant byte address 0x4 - core index']
  #allocation1 [shape = 'u32[144,128]{1,0:T(1,128)}', space=vmem, size = 0x12000, scoped, tag = 'internal scratch']
  %s0 = inlined_call_operand.vmem [shape: f32[2,3,256], index: 0, kind: input, shape index: {}]
  %s1 = inlined_call_operand.vmem [shape: f32[24,3], index: 1, kind: input, shape index: {}]
  %s2 = inlined_call_operand.vmem [shape: f32[2,24,1], index: 2, kind: output, shape index: {0}]
  %s3 = inlined_call_operand.vmem [shape: f32[2,24,1], index: 3, kind: output, shape index: {1}]
  %4 = xla_tuple %s2, %s3
  %s5 = sld [smem:[#allocation0]]
  $region53: #{tpu_custom_call.1} parent=0
    _
  %s7 = ssub.s32 1, %s5
  %s8 = scalar_select 0, %s7, %s5
  loop: start=0, step=1, limit=4
  $region2: #{tpu_custom_call.1} parent=0 // loop_pre_header
    _
  $region3: #{tpu_custom_call.1} parent=0 // loop_header
    %s10 = sphi 0, %s14
    %p11 = scmp.ge.s32.totalorder %s10, 4
    %s17 = sphi 0, %s29
    %s18 = sphi 0, %s25
    %s19 = sphi 0, %s17
    %s20 = sphi 0, %s18
    %s21 = sphi 0, %s19
    %s22 = sphi 0, %s20
    %s34 = sphi 0, %s36
    %s37 = sphi 0, %s34
    %s38 = sphi 0, %s37
    %s54 = sphi 0, %s38
    %s58 = sphi 0, %s58
    %s60 = sphi 0, %s58
    %s61 = sphi 0, %s60
    %s75 = sphi 0, %s61
    %s81 = sphi 0, %s83
    %s84 = sphi 0, %s81
    %s85 = sphi 0, %s84
    %s101 = sphi 0, %s85
    %s107 = sphi 0, %s109
    %s110 = sphi 0, %s107
    %s111 = sphi 0, %s110
    %s127 = sphi 0, %s111
  $region4: #{tpu_custom_call.1} parent=0 // loop_header_branch
    %13 = sbr.rel (%p11) target = $region8
  $region5: #{tpu_custom_call.1} parent=0 // loop_body
    %s15 = ssub.s32 %s10, 1
    %s16 = ssub.s32 %s10, 2
    %s23 = sadd.s32 1, %s18
    %p24 = scmp.ge.s32.totalorder %s23, 1
    %s25 = scalar_select %p24, 0, %s23
    %s26 = sadd.s32 1, %s17
    %s27 = scalar_select %p24, %s26, %s17
    %p28 = scmp.ge.s32.totalorder %s27, 2
    %s29 = scalar_select %p28, 0, %s27
    %s30 = ssub.s32 %s17, %s29
    %s31 = ssub.s32 %s18, %s25
    %s32 = sor.u32 %s30, %s31
    %p33 = scmp.eq.s32.totalorder %s32, 0
    %s35 = sadd.s32 %s34, 1
    %s36 = scalar_select %p33, %s34, %s35
    %p39 = pneg %p33
    %p40 = scmp.eq.s32.totalorder %s10, 1
    %p41 = por %p39, %p40
    %p42 = scmp.ne.s32.totalorder %s34, %s37
    %p43 = scmp.eq.s32.totalorder %s10, 0
    %p44 = por %p42, %p43
    %p45 = scmp.ne.s32.totalorder %s34, %s37
    %p46 = scmp.eq.s32.totalorder %s15, 1
    %p47 = por %p45, %p46
    %p48 = scmp.ne.s32.totalorder %s37, %s38
    %p49 = scmp.eq.s32.totalorder %s15, 0
    %p50 = por %p48, %p49
    %p51 = scmp.ne.s32.totalorder %s37, %s38
    %p52 = scmp.eq.s32.totalorder %s16, 1
    %p53 = por %p51, %p52
    %p55 = scmp.ne.s32.totalorder %s38, %s54
    %p56 = scmp.eq.s32.totalorder %s16, 0
    %p57 = por %p55, %p56
    %s59 = sadd.s32 %s58, 1
    %p62 = scmp.eq.s32.totalorder %s10, 1
    %p63 = scmp.ne.s32.totalorder %s58, %s60
    %p64 = scmp.eq.s32.totalorder %s10, 0
    %p65 = por %p63, %p64
    %p66 = scmp.ne.s32.totalorder %s58, %s60
    %p67 = scmp.eq.s32.totalorder %s15, 1
    %p68 = por %p66, %p67
    %p69 = scmp.ne.s32.totalorder %s60, %s61
    %p70 = scmp.eq.s32.totalorder %s15, 0
    %p71 = por %p69, %p70
    %p72 = scmp.ne.s32.totalorder %s60, %s61
    %p73 = scmp.eq.s32.totalorder %s16, 1
    %p74 = por %p72, %p73
    %p76 = scmp.ne.s32.totalorder %s61, %s75
    %p77 = scmp.eq.s32.totalorder %s16, 0
    %p78 = por %p76, %p77
    %s79 = ssub.s32 %s17, %s29
    %p80 = scmp.eq.s32.totalorder %s79, 0
    %s82 = sadd.s32 %s81, 1
    %s83 = scalar_select %p80, %s81, %s82
    %p86 = pneg %p80
    %p87 = scmp.eq.s32.totalorder %s10, 1
    %p88 = por %p86, %p87
    %p89 = scmp.ne.s32.totalorder %s81, %s84
    %p90 = scmp.eq.s32.totalorder %s10, 0
    %p91 = por %p89, %p90
    %p92 = scmp.ne.s32.totalorder %s81, %s84
    %p93 = scmp.eq.s32.totalorder %s15, 1
    %p94 = por %p92, %p93
    %p95 = scmp.ne.s32.totalorder %s84, %s85
    %p96 = scmp.eq.s32.totalorder %s15, 0
    %p97 = por %p95, %p96
    %p98 = scmp.ne.s32.totalorder %s84, %s85
    %p99 = scmp.eq.s32.totalorder %s16, 1
    %p100 = por %p98, %p99
    %p102 = scmp.ne.s32.totalorder %s85, %s101
    %p103 = scmp.eq.s32.totalorder %s16, 0
    %p104 = por %p102, %p103
    %s105 = ssub.s32 %s17, %s29
    %p106 = scmp.eq.s32.totalorder %s105, 0
    %s108 = sadd.s32 %s107, 1
    %s109 = scalar_select %p106, %s107, %s108
    %p112 = pneg %p106
    %p113 = scmp.eq.s32.totalorder %s10, 1
    %p114 = por %p112, %p113
    %p115 = scmp.ne.s32.totalorder %s107, %s110
    %p116 = scmp.eq.s32.totalorder %s10, 0
    %p117 = por %p115, %p116
    %p118 = scmp.ne.s32.totalorder %s107, %s110
    %p119 = scmp.eq.s32.totalorder %s15, 1
    %p120 = por %p118, %p119
    %p121 = scmp.ne.s32.totalorder %s110, %s111
    %p122 = scmp.eq.s32.totalorder %s15, 0
    %p123 = por %p121, %p122
    %p124 = scmp.ne.s32.totalorder %s110, %s111
    %p125 = scmp.eq.s32.totalorder %s16, 1
    %p126 = por %p124, %p125
    %p128 = scmp.ne.s32.totalorder %s111, %s127
    %p129 = scmp.eq.s32.totalorder %s16, 0
    %p130 = por %p128, %p129
    %p131 = scmp.le.s32.totalorder 1, %s10
    %p132 = scmp.lt.s32.totalorder %s10, 3
    %p133 = pnand %p131, %p132
    %p134 = pneg %p133
    // Predicated region
    $region9: #{tpu_custom_call.1} parent=5 // pred_check
      _
    $region10: #{tpu_custom_call.1} parent=5 // pred_check_branch
      %136 = sbr.rel (%p133) target = $region12
    $region11: #{tpu_custom_call.1} parent=5 // pred_region
      %s137 = ssub.s32 %s10, 1
      // Predicated region
      $region13: #{tpu_custom_call.1} parent=11 // pred_check
        %p138 = pneg %p71
      $region14: #{tpu_custom_call.1} parent=11 // pred_check_branch
        %140 = sbr.rel (%p138) target = $region16
      $region15: #{tpu_custom_call.1} parent=11 // pred_region
        _
      $region16: #{tpu_custom_call.1} parent=11 // pred_fallthru
        _
    $region12: #{tpu_custom_call.1} parent=5 // pred_fallthru
      _
    %p141 = scmp.lt.s32.totalorder %s10, 2
    // Predicated region
    $region17: #{tpu_custom_call.1} parent=5 // pred_check
      %p142 = pneg %p141
    $region18: #{tpu_custom_call.1} parent=5 // pred_check_branch
      %144 = sbr.rel (%p142) target = $region20
    $region19: #{tpu_custom_call.1} parent=5 // pred_region
      // Predicated region
      $region21: #{tpu_custom_call.1} parent=19 // pred_check
        %p145 = pneg %p44
      $region22: #{tpu_custom_call.1} parent=19 // pred_check_branch
        %147 = sbr.rel (%p145) target = $region24
      $region23: #{tpu_custom_call.1} parent=19 // pred_region
        %s148 = smul.u32 2, %s18
        %p149 = scmp.lt.s32.totalorder %s17, 1
        %s150 = scalar_select %p149, %s17, 1
        %p151 = scmp.lt.s32.totalorder %s148, 1
        %s152 = scalar_select %p151, %s148, 1
        %s153 = smul.addr %s150, 2
        %s154 = sadd.s32 %s152, %s153
        %s155 = smul.addr %s154, 4
        %s156 = scalar_lea.vmem %s0, %s155
        %s157 = smul.u32 2, %s18
      $region24: #{tpu_custom_call.1} parent=19 // pred_fallthru
        _
    $region20: #{tpu_custom_call.1} parent=5 // pred_fallthru
      _
    %p158 = scmp.le.s32.totalorder 1, %s10
    %p159 = scmp.lt.s32.totalorder %s10, 3
    %p160 = pnand %p158, %p159
    %p161 = pneg %p160
    // Predicated region
    $region25: #{tpu_custom_call.1} parent=5 // pred_check
      _
    $region26: #{tpu_custom_call.1} parent=5 // pred_check_branch
      %163 = sbr.rel (%p160) target = $region28
    $region27: #{tpu_custom_call.1} parent=5 // pred_region
      %s164 = ssub.s32 %s10, 1
      %s165 = smul.u32 2, %s20
      %p166 = scmp.lt.s32.totalorder %s19, 1
      %s167 = scalar_select %p166, %s19, 1
      %p168 = scmp.lt.s32.totalorder %s165, 1
      %s169 = scalar_select %p168, %s165, 1
      %s170 = smul.addr %s167, 2
      %s171 = sadd.s32 %s169, %s170
      %s172 = smul.addr %s171, 4
      %s173 = scalar_lea.vmem %s0, %s172
      %p174 = pneg %p50
      %p175 = pneg %p47
      %p176 = pneg %p71
      %p177 = pneg %p68
      %p178 = pneg %p97
      %p179 = pneg %p94
      %p180 = scmp.lt.s32.totalorder %s19, 1
      %s181 = scalar_select %p180, %s19, 1
      %s182 = smul.addr %s181, 3
      %s183 = smul.addr %s182, 8
      %s184 = scalar_lea.vmem %s2, %s183
      %p185 = pneg %p123
      %p186 = pneg %p120
      %p187 = scmp.lt.s32.totalorder %s19, 1
      %s188 = scalar_select %p187, %s19, 1
      %s189 = smul.addr %s188, 3
      %s190 = smul.addr %s189, 8
      %s191 = scalar_lea.vmem %s3, %s190
      %s192 = smul.u32 2, %s20
      %p193 = scmp.lt.s32.totalorder %s19, 1
      %s194 = scalar_select %p193, %s19, 1
      %p195 = scmp.lt.s32.totalorder %s192, 1
      %s196 = scalar_select %p195, %s192, 1
      %s197 = smul.addr %s194, 2
      %s198 = sadd.s32 %s196, %s197
      %s199 = smul.addr %s198, 4
      %s200 = scalar_lea.vmem %s0, %s199
      %s201 = smul.u32 2, %s20
      %p202 = scmp.lt.s32.totalorder %s19, 1
      %s203 = scalar_select %p202, %s19, 1
      %s204 = smul.addr %s203, 3
      %s205 = smul.addr %s204, 8
      %s206 = scalar_lea.vmem %s2, %s205
      %p207 = scmp.lt.s32.totalorder %s19, 1
      %s208 = scalar_select %p207, %s19, 1
      %s209 = smul.addr %s208, 3
      %s210 = smul.addr %s209, 8
      %s211 = scalar_lea.vmem %s3, %s210
      %p212 = scmp.eq.s32.totalorder %s20, 0
      // Predicated region
      $region29: #{tpu_custom_call.1} parent=27 // pred_check
        %p213 = pneg %p212
      $region30: #{tpu_custom_call.1} parent=27 // pred_check_branch
        %215 = sbr.rel (%p213) target = $region32
      $region31: #{tpu_custom_call.1} parent=27 // pred_region
        %vm216 = vcmask 7168
        %217 = vst.msk [vmem:[%s206] sm:$0xff] %vm216, 0.0
        %218 = vst.msk [vmem:[%s206 + $0x8] sm:$0xff] %vm216, 0.0
        %219 = vst.msk [vmem:[%s206 + $0x10] sm:$0xff] %vm216, 0.0
        %220 = vst.msk [vmem:[%s211] sm:$0xff] %vm216, 0.0
        %221 = vst.msk [vmem:[%s211 + $0x8] sm:$0xff] %vm216, 0.0
        %222 = vst.msk [vmem:[%s211 + $0x10] sm:$0xff] %vm216, 0.0
      $region32: #{tpu_custom_call.1} parent=27 // pred_fallthru
        _
      %v223 = vld [vmem:[%s1] sm:$0xff]
      %v224 = vld [vmem:[%s1 + $0x8] sm:$0xff]
      %v225 = vld [vmem:[%s1 + $0x10] sm:$0xff]
      %v226 = vld [vmem:[%s200] sm:$0x77]
      %v228 = vcombine.high %v226, %v226
      %vm229 = vcmask 23552
      %v231 = vsel %vm229, %v223, 0
      %v234 = vsel %vm229, %v224, 0
      %v237 = vsel %vm229, %v225, 0
      %vm239 = vcmask 1042432
      %v240 = vsel %vm239, %v226, 0
      %v242 = vsel %vm239, %v228, 0
      %244 = vmatprep.subr.mxu0 0.0
      %245 = vmatpush1.msra.mxu0 0.0
      %246 = vmatprep.subr.mxu0 0.0
      %247 = vmatpush1.msra.mxu0 0.0
      %248 = vmatprep.subr.mxu0 0.0
      %249 = vmatpush1.msra.mxu0 0.0
      %250 = vmatprep.subr.mxu0 0.0
      %251 = vmatpush1.msra.mxu0 0.0
      %252 = vmatprep.subr.mxu0 0.0
      %253 = vmatpush1.msra.mxu0 0.0
      %254 = vmatprep.subr.mxu0 0.0
      %255 = vmatpush1.msra.mxu0 0.0
      %256 = vmatprep.subr.mxu0 0.0
      %257 = vmatpush1.msra.mxu0 0.0
      %258 = vmatprep.subr.mxu0 0.0
      %259 = vmatpush1.msra.mxu0 0.0
      %260 = vmatprep.subr.mxu0 0.0
      %261 = vmatpush1.msra.mxu0 0.0
      %262 = vmatprep.subr.mxu0 0.0
      %263 = vmatpush1.msra.mxu0 0.0
      %264 = vmatprep.subr.mxu0 0.0
      %265 = vmatpush1.msra.mxu0 0.0
      %266 = vmatprep.subr.mxu0 0.0
      %267 = vmatpush1.msra.mxu0 0.0
      %268 = vmatprep.subr.mxu0 0.0
      %269 = vmatpush1.msra.mxu0 0.0
      %270 = vmatprep.subr.mxu0 0.0
      %271 = vmatpush1.msra.mxu0 0.0
      %272 = vmatprep.subr.mxu0 0.0
      %273 = vmatpush1.msra.mxu0 0.0
      %274 = vmatprep.subr.mxu0 %v242
      %275 = vmatpush1.msra.mxu0 %v240
      %276 = vmatprep.subr.mxu0 0.0
      %277 = vmatpush2.msra.mxu0 0.0
      %278 = vmatprep.subr.mxu0 0.0
      %279 = vmatpush2.msra.mxu0 0.0
      %280 = vmatprep.subr.mxu0 0.0
      %281 = vmatpush2.msra.mxu0 0.0
      %282 = vmatprep.subr.mxu0 0.0
      %283 = vmatpush2.msra.mxu0 0.0
      %284 = vmatprep.subr.mxu0 0.0
      %285 = vmatpush2.msra.mxu0 0.0
      %286 = vmatprep.subr.mxu0 0.0
      %287 = vmatpush2.msra.mxu0 0.0
      %288 = vmatprep.subr.mxu0 0.0
      %289 = vmatpush2.msra.mxu0 0.0
      %290 = vmatprep.subr.mxu0 0.0
      %291 = vmatpush2.msra.mxu0 0.0
      %292 = vmatprep.subr.mxu0 0.0
      %293 = vmatpush2.msra.mxu0 0.0
      %294 = vmatprep.subr.mxu0 0.0
      %295 = vmatpush2.msra.mxu0 0.0
      %296 = vmatprep.subr.mxu0 0.0
      %297 = vmatpush2.msra.mxu0 0.0
      %298 = vmatprep.subr.mxu0 0.0
      %299 = vmatpush2.msra.mxu0 0.0
      %300 = vmatprep.subr.mxu0 0.0
      %301 = vmatpush2.msra.mxu0 0.0
      %302 = vmatprep.subr.mxu0 0.0
      %303 = vmatpush2.msra.mxu0 0.0
      %304 = vmatprep.subr.mxu0 0.0
      %305 = vmatpush2.msra.mxu0 0.0
      %306 = vmatprep.subr.mxu0 0.0
      %307 = vmatpush2.msra.mxu0 0.0
      %308 = vmatprep.mubr.f32.mxu0 0.0
      %309 = vmatmul.mubr.f32.gmra.mxu0 %v231
      %v310 = vpop.f32.mrf.mxu0
      %v311 = vadd.f32 0.0, %v310
      %v312 = vpop.f32.mrf.mxu0
      %v313 = vadd.f32 0.0, %v312
      %314 = vmatprep.mubr.f32.mxu0 0.0
      %315 = vmatmul.mubr.f32.gmra.mxu0 %v234
      %v316 = vpop.f32.mrf.mxu0
      %v317 = vadd.f32 0.0, %v316
      %v318 = vpop.f32.mrf.mxu0
      %v319 = vadd.f32 0.0, %v318
      %320 = vmatprep.mubr.f32.mxu0 0.0
      %321 = vmatmul.mubr.f32.gmra.mxu0 %v237
      %v322 = vpop.f32.mrf.mxu0
      %v323 = vadd.f32 0.0, %v322
      %v324 = vpop.f32.mrf.mxu0
      %v325 = vadd.f32 0.0, %v324
      %326 = vdwg.mxu0
      %v327 = vld [vmem:[%s206] sm:$0xff]
      %v328 = vld [vmem:[%s206 + $0x8] sm:$0xff]
      %v329 = vld [vmem:[%s206 + $0x10] sm:$0xff]
      %v330 = vadd.f32 %v311, %v313
      %331 = vadd.xlane.f32.xlu0 %v330
      %v332 = vpop.xlane.xlu0 %331
      %v333 = vadd.f32 %v317, %v319
      %334 = vadd.xlane.f32.xlu0 %v333
      %v335 = vpop.xlane.xlu0 %334
      %v336 = vadd.f32 %v323, %v325
      %337 = vadd.xlane.f32.xlu0 %v336
      %v338 = vpop.xlane.xlu0 %337
      %v339 = vadd.f32 %v327, %v332
      %v340 = vadd.f32 %v328, %v335
      %v341 = vadd.f32 %v329, %v338
      %vm342 = vcmask 7168
      %343 = vst.msk [vmem:[%s206] sm:$0xff] %vm342, %v339
      %344 = vst.msk [vmem:[%s206 + $0x8] sm:$0xff] %vm342, %v340
      %345 = vst.msk [vmem:[%s206 + $0x10] sm:$0xff] %vm342, %v341
      %v346 = vld [vmem:[%s211] sm:$0xff]
      %v347 = vld [vmem:[%s211 + $0x8] sm:$0xff]
      %v348 = vld [vmem:[%s211 + $0x10] sm:$0xff]
      %v349 = vmul.f32 %v311, %v311
      %v350 = vmul.f32 %v313, %v313
      %v351 = vmul.f32 %v317, %v317
      %v352 = vmul.f32 %v319, %v319
      %v353 = vmul.f32 %v323, %v323
      %v354 = vmul.f32 %v325, %v325
      %v355 = vadd.f32 %v349, %v350
      %356 = vadd.xlane.f32.xlu0 %v355
      %v357 = vpop.xlane.xlu0 %356
      %v358 = vadd.f32 %v351, %v352
      %359 = vadd.xlane.f32.xlu0 %v358
      %v360 = vpop.xlane.xlu0 %359
      %v361 = vadd.f32 %v353, %v354
      %362 = vadd.xlane.f32.xlu0 %v361
      %v363 = vpop.xlane.xlu0 %362
      %v364 = vadd.f32 %v346, %v357
      %v365 = vadd.f32 %v347, %v360
      %v366 = vadd.f32 %v348, %v363
      %367 = vst.msk [vmem:[%s211] sm:$0xff] %vm342, %v364
      %368 = vst.msk [vmem:[%s211 + $0x8] sm:$0xff] %vm342, %v365
      %369 = vst.msk [vmem:[%s211 + $0x10] sm:$0xff] %vm342, %v366
      %p370 = scmp.lt.s32.totalorder %s19, 1
      %s371 = scalar_select %p370, %s19, 1
      %s372 = smul.addr %s371, 3
      %s373 = smul.addr %s372, 8
      %s374 = scalar_lea.vmem %s2, %s373
      %p375 = scmp.lt.s32.totalorder %s19, 1
      %s376 = scalar_select %p375, %s19, 1
      %s377 = smul.addr %s376, 3
      %s378 = smul.addr %s377, 8
      %s379 = scalar_lea.vmem %s3, %s378
      // Predicated region
      $region33: #{tpu_custom_call.1} parent=27 // pred_check
        %p380 = pneg %p94
      $region34: #{tpu_custom_call.1} parent=27 // pred_check_branch
        %382 = sbr.rel (%p380) target = $region36
      $region35: #{tpu_custom_call.1} parent=27 // pred_region
        _
      $region36: #{tpu_custom_call.1} parent=27 // pred_fallthru
        _
      // Predicated region
      $region37: #{tpu_custom_call.1} parent=27 // pred_check
        %p383 = pneg %p120
      $region38: #{tpu_custom_call.1} parent=27 // pred_check_branch
        %385 = sbr.rel (%p383) target = $region40
      $region39: #{tpu_custom_call.1} parent=27 // pred_region
        _
      $region40: #{tpu_custom_call.1} parent=27 // pred_fallthru
        _
    $region28: #{tpu_custom_call.1} parent=5 // pred_fallthru
      _
    %p386 = scmp.le.s32.totalorder 2, %s10
    // Predicated region
    $region41: #{tpu_custom_call.1} parent=5 // pred_check
      %p387 = pneg %p386
    $region42: #{tpu_custom_call.1} parent=5 // pred_check_branch
      %389 = sbr.rel (%p387) target = $region44
    $region43: #{tpu_custom_call.1} parent=5 // pred_region
      %s390 = ssub.s32 %s10, 2
      // Predicated region
      $region45: #{tpu_custom_call.1} parent=43 // pred_check
        %p391 = pneg %p100
      $region46: #{tpu_custom_call.1} parent=43 // pred_check_branch
        %393 = sbr.rel (%p391) target = $region48
      $region47: #{tpu_custom_call.1} parent=43 // pred_region
        %p394 = scmp.lt.s32.totalorder %s21, 1
        %s395 = scalar_select %p394, %s21, 1
        %s396 = smul.addr %s395, 3
        %s397 = smul.addr %s396, 8
        %s398 = scalar_lea.vmem %s2, %s397
      $region48: #{tpu_custom_call.1} parent=43 // pred_fallthru
        _
      // Predicated region
      $region49: #{tpu_custom_call.1} parent=43 // pred_check
        %p399 = pneg %p126
      $region50: #{tpu_custom_call.1} parent=43 // pred_check_branch
        %401 = sbr.rel (%p399) target = $region52
      $region51: #{tpu_custom_call.1} parent=43 // pred_region
        %p402 = scmp.lt.s32.totalorder %s21, 1
        %s403 = scalar_select %p402, %s21, 1
        %s404 = smul.addr %s403, 3
        %s405 = smul.addr %s404, 8
        %s406 = scalar_lea.vmem %s3, %s405
      $region52: #{tpu_custom_call.1} parent=43 // pred_fallthru
        _
    $region44: #{tpu_custom_call.1} parent=5 // pred_fallthru
      _
  $region6: #{tpu_custom_call.1} parent=0 // loop_footer
    %s14 = sadd.s32 1, %s10
  $region7: #{tpu_custom_call.1} parent=0 // loop_footer_branch
    %9 = sbr.rel target = $region3
  $region8: #{tpu_custom_call.1} parent=0 // loop_exit
    _

</llo_original>
